<compile_context>
chip_gen: v7x
topology: tpu7x:2x2x1
jax: 0.10.0
libtpu: 0.0.40
codegen_flags: <defaults>
</compile_context>

<pallas_src>
import jax
import jax.numpy as jnp
from jax import lax
from jax.experimental import pallas as pl
from jax.experimental.pallas import tpu as pltpu

# ---- small model dims consistent with MultiheadLatentAttn's structure ----
D_MODEL = 32
N_HEADS = 4
D_HEAD_V = 16
D_LATENT_KV = 32
D_LATENT_Q = 32
D_NOPE = 8
D_ROPE = 8
D_HEAD_QK = D_NOPE + D_ROPE
NORM_EPS = 1e-6          # RMSNorm default eps used by the module
B = 2
S = 8
N_TOK = B * S            # flattened token rows processed in one kernel step
SCALE = D_HEAD_QK ** (-0.5)

D_DOWN = D_LATENT_Q + D_LATENT_KV + D_ROPE    # 72  fused down-proj width
D_HCAT = D_LATENT_KV + D_ROPE                 # 40  per-head fused query width
D_QUP = N_HEADS * D_HCAT                      # 160 absorbed q up-proj width
D_OUT_PAD = 128                               # lane-dense padded output width

# ---- packed parameter-slab row layout (every block 8-row aligned) ----
ROW_WQUP = 0                                  # (32, 160) absorbed q up-proj
ROW_BQUP = 32                                 # (1, 160)
ROW_WDOWN = 40                                # (32, 72)  fused q/kv down-proj
ROW_BDOWN = 72                                # (1, 72)
ROW_GQ = 73                                   # (1, 32)   q_norm gain
ROW_GKV = 74                                  # (1, 32)   kv_norm gain
ROW_WOUT = 80                                 # (128, 128) absorbed out-proj (padded)
ROW_BO = 208                                  # (1, 128)  padded output bias
ROW_MASK = 216                                # (16, 16)  block-diag causal mask
SLAB_ROWS = 232
SLAB_COLS = D_QUP                             # 160


def _rmsnorm(x, g, eps):
    ms = jnp.mean(x * x, axis=-1, keepdims=True)
    return x * jax.lax.rsqrt(ms + eps) * g


def mla_kernel(x_ref, slab_ref, o_ref):
    x = x_ref[...]                                                    # (N_TOK, D_MODEL)

    # ---- unpack everything from the single packed VMEM slab (static slices) ----
    w_down = slab_ref[ROW_WDOWN:ROW_WDOWN + D_MODEL, 0:D_DOWN]        # (32, 72)
    b_down = slab_ref[ROW_BDOWN:ROW_BDOWN + 1, 0:D_DOWN]              # (1, 72)
    gq     = slab_ref[ROW_GQ:ROW_GQ + 1, 0:D_LATENT_Q]                # (1, 32)
    gkv    = slab_ref[ROW_GKV:ROW_GKV + 1, 0:D_LATENT_KV]             # (1, 32)
    w_qup  = slab_ref[ROW_WQUP:ROW_WQUP + D_LATENT_Q, :]              # (32, 160)
    b_qup  = slab_ref[ROW_BQUP:ROW_BQUP + 1, :]                       # (1, 160)
    b_o    = slab_ref[ROW_BO:ROW_BO + 1, 0:D_OUT_PAD]                 # (1, 128)
    mask   = slab_ref[ROW_MASK:ROW_MASK + N_TOK, 0:N_TOK]             # (16, 16)

    # head-tiled mask, hoisted once before scoring
    mask_h = jnp.concatenate([mask] * N_HEADS, axis=0)                # (H*N, N)

    # ---- fused q/kv down-projection: one (N,32)x(32,72) matmul ----
    down = jnp.dot(x, w_down, preferred_element_type=jnp.float32) + b_down
    qa     = down[:, :D_LATENT_Q]                                     # (N, 32)
    kv     = down[:, D_LATENT_Q:D_LATENT_Q + D_LATENT_KV]             # (N, 32)
    k_rope = down[:, D_LATENT_Q + D_LATENT_KV:]                       # (N, 8)

    qa_n = _rmsnorm(qa, gq, NORM_EPS)
    kv_n = _rmsnorm(kv, gkv, NORM_EPS)                                # == kv_cache[:, :S]

    # ---- absorbed q up-projection: one (N,32)x(32,160) matmul ----
    # per-head contiguous columns: head h owns cols [h*40, (h+1)*40) laid out as
    # [nope already mapped into latent-kv space (32) | rope queries (8)]
    qup = jnp.dot(qa_n, w_qup, preferred_element_type=jnp.float32) + b_qup

    # stack heads along sublanes (head-major rows h*N_TOK + n); 4 static slices
    q_cat = jnp.concatenate(
        [qup[:, h * D_HCAT:(h + 1) * D_HCAT] for h in range(N_HEADS)], axis=0)  # (H*N, 40)
    k_cat = jnp.concatenate([kv_n, k_rope], axis=1)                              # (N, 40)

    # ---- fused attention scores for all heads at once: one (H*N,40)x(40,N) ----
    dn = (((1,), (1,)), ((), ()))                                     # A @ B.T
    scores = lax.dot_general(q_cat, k_cat, dn, preferred_element_type=jnp.float32)
    scores = scores * SCALE + mask_h

    # ---- softmax over keys (stand-in for ScalableSoftmax) ----
    m = jnp.max(scores, axis=-1, keepdims=True)
    p = jnp.exp(scores - m)
    p = p / jnp.sum(p, axis=-1, keepdims=True)

    # ---- latent values for all heads: one (H*N,N)x(N,32) matmul ----
    v_lat = jnp.dot(p, kv_n, preferred_element_type=jnp.float32)      # (H*N, C)

    # ---- absorbed (wkv_b value-block . wo) output projection ----
    # unrolled per-head accumulate: avoids the lane-offset concat; MXU has slack
    acc = b_o                                                         # (1, 128) -> broadcasts
    for h in range(N_HEADS):
        w_out_h = slab_ref[ROW_WOUT + h * D_LATENT_KV:
                           ROW_WOUT + (h + 1) * D_LATENT_KV, 0:D_OUT_PAD]   # (32, 128)
        acc = acc + jnp.dot(v_lat[h * N_TOK:(h + 1) * N_TOK, :], w_out_h,
                            preferred_element_type=jnp.float32)
    o_ref[...] = acc                                                  # lane-dense (16, 128)


@jax.jit
def mla_forward(h, slab):
    x = h.reshape(N_TOK, D_MODEL)
    # Single grid step: both operands are full-array VMEM blocks; total working
    # set is ~150 KB, so there is nothing to pipeline or double-buffer.
    out = pl.pallas_call(
        mla_kernel,
        out_shape=jax.ShapeDtypeStruct((N_TOK, D_OUT_PAD), jnp.float32),
        in_specs=[pl.BlockSpec(memory_space=pltpu.MemorySpace.VMEM),
                  pl.BlockSpec(memory_space=pltpu.MemorySpace.VMEM)],
        out_specs=pl.BlockSpec(memory_space=pltpu.MemorySpace.VMEM),
    )(x, slab)
    return out[:, :D_MODEL].reshape(B, S, D_MODEL)


# ----------------------------- pure-JAX reference -----------------------------
def mla_reference(h, mask, raw_params):
    (wqa, bqa, gq, wqb, bqb, wkva, bkva, gkv, wkvb, wo, bo) = raw_params
    qa = h @ wqa.T + bqa
    qa = _rmsnorm(qa, gq, NORM_EPS)
    q = (qa @ wqb.T + bqb).reshape(B, S, N_HEADS, D_HEAD_QK)
    q_nope, q_rope = q[..., :D_NOPE], q[..., D_NOPE:]
    kva = h @ wkva.T + bkva
    kv, k_rope = kva[..., :D_LATENT_KV], kva[..., D_LATENT_KV:]
    kv_n = _rmsnorm(kv, gkv, NORM_EPS)
    wkvb_r = wkvb.reshape(N_HEADS, D_NOPE + D_HEAD_V, D_LATENT_KV)
    q_nope_kv = jnp.einsum('bshn,hnc->bshc', q_nope, wkvb_r[:, :D_NOPE])
    scores = (jnp.einsum('bshc,btc->bsht', q_nope_kv, kv_n)
              + jnp.einsum('bshr,btr->bsht', q_rope, k_rope)) * SCALE
    scores = scores + mask[None, :, None, :]
    p = jax.nn.softmax(scores, axis=-1)
    v_lat = jnp.einsum('bsht,btc->bshc', p, kv_n)
    v = jnp.einsum('bshc,hvc->bshv', v_lat, wkvb_r[:, D_NOPE:])
    return v.reshape(B, S, N_HEADS * D_HEAD_V) @ wo.T + bo


# ----------------------------- parameter construction -----------------------------
def make_params(key):
    ks = jax.random.split(key, 9)
    n = lambda k, shape, s=0.05: (s * jax.random.normal(k, shape)).astype(jnp.float32)
    wqa = n(ks[0], (D_LATENT_Q, D_MODEL))
    bqa = n(ks[1], (D_LATENT_Q,), 0.01)
    gq = jnp.ones((D_LATENT_Q,), jnp.float32)
    wqb = n(ks[2], (N_HEADS * D_HEAD_QK, D_LATENT_Q))
    bqb = n(ks[3], (N_HEADS * D_HEAD_QK,), 0.01)
    wkva = n(ks[4], (D_LATENT_KV + D_ROPE, D_MODEL))
    bkva = n(ks[5], (D_LATENT_KV + D_ROPE,), 0.01)
    gkv = jnp.ones((D_LATENT_KV,), jnp.float32)
    wkvb = n(ks[6], (N_HEADS * (D_NOPE + D_HEAD_V), D_LATENT_KV))
    wo = n(ks[7], (D_MODEL, N_HEADS * D_HEAD_V))
    bo = n(ks[8], (D_MODEL,), 0.01)
    return (wqa, bqa, gq, wqb, bqb, wkva, bkva, gkv, wkvb, wo, bo)


def pack_params(raw_params, mask_ss):
    """Offline MLA weight absorption + packing of every operand (incl. mask)
    into one lane-padded f32 slab consumed by the kernel as a single DMA."""
    (wqa, bqa, gq, wqb, bqb, wkva, bkva, gkv, wkvb, wo, bo) = raw_params

    # fused down projection: x -> [qa | kv | k_rope]
    w_down = jnp.concatenate([wqa.T, wkva.T], axis=1)                 # (32, 72)
    b_down = jnp.concatenate([bqa, bkva])                             # (72,)

    wqb_r = wqb.reshape(N_HEADS, D_HEAD_QK, D_LATENT_Q)
    bqb_r = bqb.reshape(N_HEADS, D_HEAD_QK)
    wkvb_r = wkvb.reshape(N_HEADS, D_NOPE + D_HEAD_V, D_LATENT_KV)
    wkvb_nope = wkvb_r[:, :D_NOPE, :]                                 # (H, 8, 32)
    wkvb_v = wkvb_r[:, D_NOPE:, :]                                    # (H, 16, 32)

    # absorb wq_b(nope) into wkv_b(nope): qa_n -> per-head latent-space queries
    w_qnk_h = jnp.einsum('hnq,hnc->hqc', wqb_r[:, :D_NOPE, :], wkvb_nope)   # (H, 32, 32)
    b_qnk_h = jnp.einsum('hn,hnc->hc', bqb_r[:, :D_NOPE], wkvb_nope)        # (H, 32)
    w_qr_h = jnp.transpose(wqb_r[:, D_NOPE:, :], (0, 2, 1))                 # (H, 32, 8)
    b_qr_h = bqb_r[:, D_NOPE:]                                              # (H, 8)

    # per-head contiguous columns: [absorbed-nope(32) | rope(8)] per head
    w_qup = jnp.concatenate([w_qnk_h, w_qr_h], axis=2)                      # (H, 32, 40)
    w_qup = jnp.transpose(w_qup, (1, 0, 2)).reshape(D_LATENT_Q, D_QUP)      # (32, 160)
    b_qup = jnp.concatenate([b_qnk_h, b_qr_h], axis=1).reshape(-1)          # (160,)

    # absorb wkv_b(value block) into wo: rows h*C + c -> d_model
    wo_r = wo.reshape(D_MODEL, N_HEADS, D_HEAD_V)
    w_out = jnp.einsum('hvc,dhv->hcd', wkvb_v, wo_r).reshape(
        N_HEADS * D_LATENT_KV, D_MODEL)                                     # (128, 32)

    # block-diagonal (over batch) causal mask for the flattened token slab
    neg = jnp.full((S, S), -1e9, jnp.float32)
    mask_full = jnp.concatenate(
        [jnp.concatenate([mask_ss if bb == bi else neg for bb in range(B)], axis=1)
         for bi in range(B)], axis=0)                                       # (N_TOK, N_TOK)

    slab = jnp.zeros((SLAB_ROWS, SLAB_COLS), jnp.float32)
    slab = slab.at[ROW_WQUP:ROW_WQUP + D_LATENT_Q, :].set(w_qup)
    slab = slab.at[ROW_BQUP, :].set(b_qup)
    slab = slab.at[ROW_WDOWN:ROW_WDOWN + D_MODEL, :D_DOWN].set(w_down)
    slab = slab.at[ROW_BDOWN, :D_DOWN].set(b_down)
    slab = slab.at[ROW_GQ, :D_LATENT_Q].set(gq)
    slab = slab.at[ROW_GKV, :D_LATENT_KV].set(gkv)
    slab = slab.at[ROW_WOUT:ROW_WOUT + N_HEADS * D_LATENT_KV, :D_MODEL].set(w_out)
    slab = slab.at[ROW_BO, :D_MODEL].set(bo)                                # cols 32:128 stay 0
    slab = slab.at[ROW_MASK:ROW_MASK + N_TOK, :N_TOK].set(mask_full)
    return slab


if __name__ == "__main__":
    key = jax.random.PRNGKey(0)
    k_h, k_p = jax.random.split(key)
    h = jax.random.normal(k_h, (B, S, D_MODEL), dtype=jnp.float32)

    # causal mask (start_pos = 0), shape (S, S), broadcast over batch & heads
    causal = jnp.tril(jnp.ones((S, S), dtype=bool))
    mask = jnp.where(causal, 0.0, -1e9).astype(jnp.float32)

    raw_params = make_params(k_p)
    slab = pack_params(raw_params, mask)

    out = mla_forward(h, slab)
    out = jax.block_until_ready(out)

    ref = mla_reference(h, mask, raw_params)
    assert out.shape == (B, S, D_MODEL)
    assert jnp.allclose(out, ref, rtol=1e-4, atol=1e-4), (
        f"max abs err {float(jnp.max(jnp.abs(out - ref)))}")

    print("KERNEL_OK")
</pallas_src>

<mosaic_0001>
module attributes {stable_mosaic.version = 11 : i64} {
  func.func @mla_kernel(%arg0: memref<16x32xf32, #tpu.memory_space<vmem>>, %arg1: memref<232x160xf32, #tpu.memory_space<vmem>>, %arg2: memref<16x128xf32, #tpu.memory_space<vmem>>) attributes {dimension_semantics = [], scalar_prefetch = 0 : i64, scratch_operands = 0 : i64, tpu.core_type = #tpu.core_type<tc>} {
    %c0 = arith.constant 0 : index
    %c0_0 = arith.constant 0 : index
    %0 = vector.load %arg0[%c0, %c0_0] : memref<16x32xf32, #tpu.memory_space<vmem>>, vector<16x32xf32>
    %c40 = arith.constant 40 : index
    %c0_1 = arith.constant 0 : index
    %1 = vector.load %arg1[%c40, %c0_1] : memref<232x160xf32, #tpu.memory_space<vmem>>, vector<32x72xf32>
    %c72 = arith.constant 72 : index
    %c0_2 = arith.constant 0 : index
    %2 = vector.load %arg1[%c72, %c0_2] : memref<232x160xf32, #tpu.memory_space<vmem>>, vector<1x72xf32>
    %c73 = arith.constant 73 : index
    %c0_3 = arith.constant 0 : index
    %3 = vector.load %arg1[%c73, %c0_3] : memref<232x160xf32, #tpu.memory_space<vmem>>, vector<1x32xf32>
    %c74 = arith.constant 74 : index
    %c0_4 = arith.constant 0 : index
    %4 = vector.load %arg1[%c74, %c0_4] : memref<232x160xf32, #tpu.memory_space<vmem>>, vector<1x32xf32>
    %c0_5 = arith.constant 0 : index
    %c0_6 = arith.constant 0 : index
    %5 = vector.load %arg1[%c0_5, %c0_6] : memref<232x160xf32, #tpu.memory_space<vmem>>, vector<32x160xf32>
    %c32 = arith.constant 32 : index
    %c0_7 = arith.constant 0 : index
    %6 = vector.load %arg1[%c32, %c0_7] : memref<232x160xf32, #tpu.memory_space<vmem>>, vector<1x160xf32>
    %c208 = arith.constant 208 : index
    %c0_8 = arith.constant 0 : index
    %7 = vector.load %arg1[%c208, %c0_8] : memref<232x160xf32, #tpu.memory_space<vmem>>, vector<1x128xf32>
    %c216 = arith.constant 216 : index
    %c0_9 = arith.constant 0 : index
    %8 = vector.load %arg1[%c216, %c0_9] : memref<232x160xf32, #tpu.memory_space<vmem>>, vector<16x16xf32>
    %9 = tpu.concatenate %8, %8, %8, %8 in 0 : vector<16x16xf32>, vector<16x16xf32>, vector<16x16xf32>, vector<16x16xf32> -> vector<64x16xf32>
    %cst = arith.constant dense<0.000000e+00> : vector<16x72xf32>
    %10 = tpu.matmul %0, %1, %cst {dimension_numbers = #tpu.dot_dimension_numbers<[1], [0], [0], [1], [0, 0, 1, 1], [], []>} : vector<16x32xf32>, vector<32x72xf32>, vector<16x72xf32> -> vector<16x72xf32>
    %11 = vector.broadcast %2 : vector<1x72xf32> to vector<16x72xf32>
    %12 = arith.addf %10, %11 : vector<16x72xf32>
    %13 = vector.extract_strided_slice %12 {offsets = [0, 0], sizes = [16, 32], strides = [1, 1]} : vector<16x72xf32> to vector<16x32xf32>
    %14 = vector.extract_strided_slice %12 {offsets = [0, 32], sizes = [16, 32], strides = [1, 1]} : vector<16x72xf32> to vector<16x32xf32>
    %15 = vector.extract_strided_slice %12 {offsets = [0, 64], sizes = [16, 8], strides = [1, 1]} : vector<16x72xf32> to vector<16x8xf32>
    %16 = arith.mulf %13, %13 : vector<16x32xf32>
    %cst_10 = arith.constant dense<0.000000e+00> : vector<16xf32>
    %17 = vector.multi_reduction <add>, %16, %cst_10 [1] : vector<16x32xf32> to vector<16xf32>
    %18 = vector.shape_cast %17 : vector<16xf32> to vector<16x1xf32>
    %cst_11 = arith.constant 3.200000e+01 : f32
    %19 = vector.broadcast %cst_11 : f32 to vector<16x1xf32>
    %20 = arith.divf %18, %19 : vector<16x1xf32>
    %cst_12 = arith.constant 9.99999997E-7 : f32
    %21 = vector.broadcast %cst_12 : f32 to vector<16x1xf32>
    %22 = arith.addf %20, %21 : vector<16x1xf32>
    %23 = math.rsqrt %22 : vector<16x1xf32>
    %24 = vector.broadcast %23 : vector<16x1xf32> to vector<16x32xf32>
    %25 = arith.mulf %13, %24 : vector<16x32xf32>
    %26 = vector.broadcast %3 : vector<1x32xf32> to vector<16x32xf32>
    %27 = arith.mulf %25, %26 : vector<16x32xf32>
    %28 = arith.mulf %14, %14 : vector<16x32xf32>
    %cst_13 = arith.constant dense<0.000000e+00> : vector<16xf32>
    %29 = vector.multi_reduction <add>, %28, %cst_13 [1] : vector<16x32xf32> to vector<16xf32>
    %30 = vector.shape_cast %29 : vector<16xf32> to vector<16x1xf32>
    %cst_14 = arith.constant 3.200000e+01 : f32
    %31 = vector.broadcast %cst_14 : f32 to vector<16x1xf32>
    %32 = arith.divf %30, %31 : vector<16x1xf32>
    %cst_15 = arith.constant 9.99999997E-7 : f32
    %33 = vector.broadcast %cst_15 : f32 to vector<16x1xf32>
    %34 = arith.addf %32, %33 : vector<16x1xf32>
    %35 = math.rsqrt %34 : vector<16x1xf32>
    %36 = vector.broadcast %35 : vector<16x1xf32> to vector<16x32xf32>
    %37 = arith.mulf %14, %36 : vector<16x32xf32>
    %38 = vector.broadcast %4 : vector<1x32xf32> to vector<16x32xf32>
    %39 = arith.mulf %37, %38 : vector<16x32xf32>
    %cst_16 = arith.constant dense<0.000000e+00> : vector<16x160xf32>
    %40 = tpu.matmul %27, %5, %cst_16 {dimension_numbers = #tpu.dot_dimension_numbers<[1], [0], [0], [1], [0, 0, 1, 1], [], []>} : vector<16x32xf32>, vector<32x160xf32>, vector<16x160xf32> -> vector<16x160xf32>
    %41 = vector.broadcast %6 : vector<1x160xf32> to vector<16x160xf32>
    %42 = arith.addf %40, %41 : vector<16x160xf32>
    %43 = vector.extract_strided_slice %42 {offsets = [0, 0], sizes = [16, 40], strides = [1, 1]} : vector<16x160xf32> to vector<16x40xf32>
    %44 = vector.extract_strided_slice %42 {offsets = [0, 40], sizes = [16, 40], strides = [1, 1]} : vector<16x160xf32> to vector<16x40xf32>
    %45 = vector.extract_strided_slice %42 {offsets = [0, 80], sizes = [16, 40], strides = [1, 1]} : vector<16x160xf32> to vector<16x40xf32>
    %46 = vector.extract_strided_slice %42 {offsets = [0, 120], sizes = [16, 40], strides = [1, 1]} : vector<16x160xf32> to vector<16x40xf32>
    %47 = tpu.concatenate %43, %44, %45, %46 in 0 : vector<16x40xf32>, vector<16x40xf32>, vector<16x40xf32>, vector<16x40xf32> -> vector<64x40xf32>
    %48 = tpu.concatenate %39, %15 in 1 : vector<16x32xf32>, vector<16x8xf32> -> vector<16x40xf32>
    %cst_17 = arith.constant dense<0.000000e+00> : vector<64x16xf32>
    %49 = tpu.matmul %47, %48, %cst_17 {dimension_numbers = #tpu.dot_dimension_numbers<[1], [1], [0], [0], [0, 0, 1, 0], [], []>} : vector<64x40xf32>, vector<16x40xf32>, vector<64x16xf32> -> vector<64x16xf32>
    %cst_18 = arith.constant 2.500000e-01 : f32
    %50 = vector.broadcast %cst_18 : f32 to vector<64x16xf32>
    %51 = arith.mulf %49, %50 : vector<64x16xf32>
    %52 = arith.addf %51, %9 : vector<64x16xf32>
    %cst_19 = arith.constant dense<0xFF800000> : vector<64xf32>
    %53 = vector.multi_reduction <maximumf>, %52, %cst_19 [1] : vector<64x16xf32> to vector<64xf32>
    %54 = vector.shape_cast %53 : vector<64xf32> to vector<64x1xf32>
    %55 = vector.broadcast %54 : vector<64x1xf32> to vector<64x16xf32>
    %56 = arith.subf %52, %55 : vector<64x16xf32>
    %57 = math.exp %56 : vector<64x16xf32>
    %cst_20 = arith.constant dense<0.000000e+00> : vector<64xf32>
    %58 = vector.multi_reduction <add>, %57, %cst_20 [1] : vector<64x16xf32> to vector<64xf32>
    %59 = vector.shape_cast %58 : vector<64xf32> to vector<64x1xf32>
    %60 = vector.broadcast %59 : vector<64x1xf32> to vector<64x16xf32>
    %61 = arith.divf %57, %60 : vector<64x16xf32>
    %cst_21 = arith.constant dense<0.000000e+00> : vector<64x32xf32>
    %62 = tpu.matmul %61, %39, %cst_21 {dimension_numbers = #tpu.dot_dimension_numbers<[1], [0], [0], [1], [0, 0, 1, 1], [], []>} : vector<64x16xf32>, vector<16x32xf32>, vector<64x32xf32> -> vector<64x32xf32>
    %c80 = arith.constant 80 : index
    %c0_22 = arith.constant 0 : index
    %63 = vector.load %arg1[%c80, %c0_22] : memref<232x160xf32, #tpu.memory_space<vmem>>, vector<32x128xf32>
    %64 = vector.extract_strided_slice %62 {offsets = [0, 0], sizes = [16, 32], strides = [1, 1]} : vector<64x32xf32> to vector<16x32xf32>
    %cst_23 = arith.constant dense<0.000000e+00> : vector<16x128xf32>
    %65 = tpu.matmul %64, %63, %cst_23 {dimension_numbers = #tpu.dot_dimension_numbers<[1], [0], [0], [1], [0, 0, 1, 1], [], []>} : vector<16x32xf32>, vector<32x128xf32>, vector<16x128xf32> -> vector<16x128xf32>
    %66 = vector.broadcast %7 : vector<1x128xf32> to vector<16x128xf32>
    %67 = arith.addf %66, %65 : vector<16x128xf32>
    %c112 = arith.constant 112 : index
    %c0_24 = arith.constant 0 : index
    %68 = vector.load %arg1[%c112, %c0_24] : memref<232x160xf32, #tpu.memory_space<vmem>>, vector<32x128xf32>
    %69 = vector.extract_strided_slice %62 {offsets = [16, 0], sizes = [16, 32], strides = [1, 1]} : vector<64x32xf32> to vector<16x32xf32>
    %cst_25 = arith.constant dense<0.000000e+00> : vector<16x128xf32>
    %70 = tpu.matmul %69, %68, %cst_25 {dimension_numbers = #tpu.dot_dimension_numbers<[1], [0], [0], [1], [0, 0, 1, 1], [], []>} : vector<16x32xf32>, vector<32x128xf32>, vector<16x128xf32> -> vector<16x128xf32>
    %71 = arith.addf %67, %70 : vector<16x128xf32>
    %c144 = arith.constant 144 : index
    %c0_26 = arith.constant 0 : index
    %72 = vector.load %arg1[%c144, %c0_26] : memref<232x160xf32, #tpu.memory_space<vmem>>, vector<32x128xf32>
    %73 = vector.extract_strided_slice %62 {offsets = [32, 0], sizes = [16, 32], strides = [1, 1]} : vector<64x32xf32> to vector<16x32xf32>
    %cst_27 = arith.constant dense<0.000000e+00> : vector<16x128xf32>
    %74 = tpu.matmul %73, %72, %cst_27 {dimension_numbers = #tpu.dot_dimension_numbers<[1], [0], [0], [1], [0, 0, 1, 1], [], []>} : vector<16x32xf32>, vector<32x128xf32>, vector<16x128xf32> -> vector<16x128xf32>
    %75 = arith.addf %71, %74 : vector<16x128xf32>
    %c176 = arith.constant 176 : index
    %c0_28 = arith.constant 0 : index
    %76 = vector.load %arg1[%c176, %c0_28] : memref<232x160xf32, #tpu.memory_space<vmem>>, vector<32x128xf32>
    %77 = vector.extract_strided_slice %62 {offsets = [48, 0], sizes = [16, 32], strides = [1, 1]} : vector<64x32xf32> to vector<16x32xf32>
    %cst_29 = arith.constant dense<0.000000e+00> : vector<16x128xf32>
    %78 = tpu.matmul %77, %76, %cst_29 {dimension_numbers = #tpu.dot_dimension_numbers<[1], [0], [0], [1], [0, 0, 1, 1], [], []>} : vector<16x32xf32>, vector<32x128xf32>, vector<16x128xf32> -> vector<16x128xf32>
    %79 = arith.addf %75, %78 : vector<16x128xf32>
    %c0_30 = arith.constant 0 : index
    %c0_31 = arith.constant 0 : index
    %80 = vector.load %arg2[%c0_30, %c0_31] : memref<16x128xf32, #tpu.memory_space<vmem>>, vector<16x128xf32>
    tpu.vector_store %arg2[%c0_30, %c0_31], %79 {strides = array<i32>} : memref<16x128xf32, #tpu.memory_space<vmem>>, vector<16x128xf32>,
    return
  }
}

</mosaic_0001>

<llo_original>
// kernel: mla_forward.1
$region0: #{mla_forward.1}
  #allocation0 [shape = 'u32[]', space=smem, size = 0x4, offset = 0x4, fixed_abs, tag = 'smem constant byte address 0x4 - core index']
  #allocation1 [shape = 'u32[144,128]{1,0:T(1,128)}', space=vmem, size = 0x12000, scoped, tag = 'internal scratch']
  %s0 = inlined_call_operand.vmem [shape: f32[16,32], index: 0, kind: input, shape index: {}]
  %s1 = inlined_call_operand.vmem [shape: f32[232,160], index: 1, kind: input, shape index: {}]
  %s2 = inlined_call_operand.vmem [shape: f32[16,128], index: 2, kind: output, shape index: {}]
  %s3 = sld [smem:[#allocation0]]
  $region18: #{mla_forward.1} parent=0
    _
  %s5 = ssub.s32 1, %s3
  %s6 = scalar_select 0, %s5, %s3
  // Predicated region
  $region2: #{mla_forward.1} parent=0 // pred_check
    _
  $region3: #{mla_forward.1} parent=0 // pred_check_branch
    %8 = sbr.rel (0) target = $region5
  $region4: #{mla_forward.1} parent=0 // pred_region
    _
  $region5: #{mla_forward.1} parent=0 // pred_fallthru
    _
  // Predicated region
  $region6: #{mla_forward.1} parent=0 // pred_check
    _
  $region7: #{mla_forward.1} parent=0 // pred_check_branch
    %10 = sbr.rel (0) target = $region9
  $region8: #{mla_forward.1} parent=0 // pred_region
    _
  $region9: #{mla_forward.1} parent=0 // pred_fallthru
    _
  %v11 = vld [vmem:[%s0] sm:$0xff]
  %v12 = vld [vmem:[%s0 + $0x8] sm:$0xff]
  %v13 = vld [vmem:[%s1 + $0x50] sm:$0xff]
  %v14 = vld [vmem:[%s1 + $0x60] sm:$0xff]
  %v15 = vld [vmem:[%s1 + $0x70] sm:$0xff]
  %v16 = vld [vmem:[%s1 + $0x80] sm:$0xff]
  %v17 = vld [vmem:[%s1 + $0x90] ss:$0 sm:$0xff]
  %v18 = vld [vmem:[%s1 + $0x91] ss:$0 sm:$0xff]
  %v19 = vld [vmem:[%s1 + $0x92] ss:$0 sm:$0xff]
  %v20 = vld [vmem:[%s1] sm:$0xff]
  %v21 = vld [vmem:[%s1 + $0x8] sm:$0xff]
  %v22 = vld [vmem:[%s1 + $0x10] sm:$0xff]
  %v23 = vld [vmem:[%s1 + $0x18] sm:$0xff]
  %v24 = vld [vmem:[%s1 + $0x20] sm:$0xff]
  %v25 = vld [vmem:[%s1 + $0x28] sm:$0xff]
  %v26 = vld [vmem:[%s1 + $0x30] sm:$0xff]
  %v27 = vld [vmem:[%s1 + $0x38] sm:$0xff]
  %s28 = scalar_lea.vmem %s1, 64
  %v29 = vld [vmem:[%s28] ss:$8 sm:$0x3]
  %v30 = vld [vmem:[%s1 + $0x1a0] ss:$0 sm:$0xff]
  %v31 = vld [vmem:[%s1 + $0x1b0] sm:$0xff]
  %v32 = vld [vmem:[%s1 + $0x1c0] sm:$0xff]
  %vm33 = vcmask 261120
  %v35 = vsel %vm33, %v11, 0
  %v38 = vsel %vm33, %v12, 0
  %40 = vmatprep.subr.mxu0 0.0
  %41 = vmatpush1.msra.mxu0 %v13
  %42 = vmatprep.subr.mxu0 0.0
  %43 = vmatpush1.msra.mxu0 %v14
  %44 = vmatprep.subr.mxu0 0.0
  %45 = vmatpush1.msra.mxu0 %v15
  %46 = vmatprep.subr.mxu0 0.0
  %47 = vmatpush1.msra.mxu0 %v16
  %48 = vmatprep.subr.mxu0 0.0
  %49 = vmatpush1.msra.mxu0 0.0
  %50 = vmatprep.subr.mxu0 0.0
  %51 = vmatpush1.msra.mxu0 0.0
  %52 = vmatprep.subr.mxu0 0.0
  %53 = vmatpush1.msra.mxu0 0.0
  %54 = vmatprep.subr.mxu0 0.0
  %55 = vmatpush1.msra.mxu0 0.0
  %56 = vmatprep.subr.mxu0 0.0
  %57 = vmatpush1.msra.mxu0 0.0
  %58 = vmatprep.subr.mxu0 0.0
  %59 = vmatpush1.msra.mxu0 0.0
  %60 = vmatprep.subr.mxu0 0.0
  %61 = vmatpush1.msra.mxu0 0.0
  %62 = vmatprep.subr.mxu0 0.0
  %63 = vmatpush1.msra.mxu0 0.0
  %64 = vmatprep.subr.mxu0 0.0
  %65 = vmatpush1.msra.mxu0 0.0
  %66 = vmatprep.subr.mxu0 0.0
  %67 = vmatpush1.msra.mxu0 0.0
  %68 = vmatprep.subr.mxu0 0.0
  %69 = vmatpush1.msra.mxu0 0.0
  %70 = vmatprep.subr.mxu0 0.0
  %71 = vmatpush1.msra.mxu0 0.0
  %72 = vmatprep.subr.mxu0 0.0
  %73 = vmatpush1.msra.mxu0 0.0
  %74 = vmatprep.subr.mxu0 0.0
  %75 = vmatpush1.msra.mxu0 0.0
  %76 = vmatprep.subr.mxu0 0.0
  %77 = vmatpush1.msra.mxu0 0.0
  %78 = vmatprep.subr.mxu0 0.0
  %79 = vmatpush1.msra.mxu0 0.0
  %80 = vmatprep.subr.mxu0 0.0
  %81 = vmatpush1.msra.mxu0 0.0
  %82 = vmatprep.subr.mxu0 0.0
  %83 = vmatpush1.msra.mxu0 0.0
  %84 = vmatprep.subr.mxu0 0.0
  %85 = vmatpush1.msra.mxu0 0.0
  %86 = vmatprep.subr.mxu0 0.0
  %87 = vmatpush1.msra.mxu0 0.0
  %88 = vmatprep.subr.mxu0 0.0
  %89 = vmatpush1.msra.mxu0 0.0
  %90 = vmatprep.subr.mxu0 0.0
  %91 = vmatpush1.msra.mxu0 0.0
  %92 = vmatprep.subr.mxu0 0.0
  %93 = vmatpush1.msra.mxu0 0.0
  %94 = vmatprep.subr.mxu0 0.0
  %95 = vmatpush1.msra.mxu0 0.0
  %96 = vmatprep.subr.mxu0 0.0
  %97 = vmatpush1.msra.mxu0 0.0
  %98 = vmatprep.subr.mxu0 0.0
  %99 = vmatpush1.msra.mxu0 0.0
  %100 = vmatprep.subr.mxu0 0.0
  %101 = vmatpush1.msra.mxu0 0.0
  %102 = vmatprep.subr.mxu0 0.0
  %103 = vmatpush1.msra.mxu0 0.0
  %104 = vmatprep.mubr.f32.mxu0 0.0
  %105 = vmatmul.mubr.f32.gmra.mrb[0].mxu0 %v35
  %v106 = vpop.f32.mrb[0].mxu0
  %v107 = vadd.f32 %v17, %v106
  %v108 = vpop.f32.mrb[0].mxu0
  %109 = vmatprep.mubr.f32.mxu0 0.0
  %110 = vmatmul.mubr.f32.gmra.mrb[0].mxu0 %v38
  %v111 = vpop.f32.mrb[0].mxu0
  %v112 = vadd.f32 %v17, %v111
  %v113 = vpop.f32.mrb[0].mxu0
  %114 = vdwg.mxu0
  %v115 = vmul.f32 %v107, %v107
  %v116 = vmul.f32 %v112, %v112
  %v117 = vsel %vm33, %v115, 0.0
  %118 = vadd.xlane.f32.xlu0 %v117
  %v119 = vpop.xlane.xlu0 %118
  %v120 = vsel %vm33, %v116, 0.0
  %121 = vadd.xlane.f32.xlu0 %v120
  %v122 = vpop.xlane.xlu0 %121
  %v123 = vrcp.pop 32.0
  %v124 = vmul.f32 %v119, %v123
  %v125 = vmul.f32 %v122, %v123
  %v126 = vadd.f32 %v124, 1e-06
  %v127 = vadd.f32 %v125, 1e-06
  %v128 = vrsqrt.pop %v126
  %v129 = vrsqrt.pop %v127
  %v130 = vmul.f32 %v107, %v128
  %v131 = vmul.f32 %v112, %v129
  %v132 = vmul.f32 %v130, %v18
  %v133 = vmul.f32 %v131, %v18
  %136 = vrot.lane.b32.xlu0 %v115, 96
  %v137 = vpop.permute.xlu0 %136
  %138 = vrot.lane.b32.xlu0 %v116, 96
  %v139 = vpop.permute.xlu0 %138
  %v142 = vsel %vm33, %v137, 0.0
  %143 = vadd.xlane.f32.xlu0 %v142
  %v144 = vpop.xlane.xlu0 %143
  %v145 = vsel %vm33, %v139, 0.0
  %146 = vadd.xlane.f32.xlu0 %v145
  %v147 = vpop.xlane.xlu0 %146
  %v148 = vmul.f32 %v144, %v123
  %v149 = vmul.f32 %v147, %v123
  %v150 = vadd.f32 %v148, 1e-06
  %v151 = vadd.f32 %v149, 1e-06
  %v152 = vrsqrt.pop %v150
  %v153 = vrsqrt.pop %v151
  %v154 = vmul.f32 %v107, %v152
  %v155 = vmul.f32 %v112, %v153
  %157 = vrot.lane.b32.xlu0 %v19, 32
  %v158 = vpop.permute.xlu0 %157
  %v160 = vmul.f32 %v154, %v158
  %v161 = vmul.f32 %v155, %v158
  %v163 = vlaneseq
  %v164 = vshrl.u32 %v163, 7
  %v165 = vsub.s32 0, %v164
  %v166 = vrot.slane %v29, %v165
  %v167 = vlaneseq
  %v168 = vshrl.u32 %v167, 7
  %v169 = vsub.s32 1, %v168
  %v170 = vrot.slane %v29, %v169
  %v174 = vsel %vm33, %v132, 0
  %v177 = vsel %vm33, %v133, 0
  %179 = vmatprep.subr.mxu0 %v21
  %180 = vmatpush1.msra.mxu0 %v20
  %181 = vmatprep.subr.mxu0 %v23
  %182 = vmatpush1.msra.mxu0 %v22
  %183 = vmatprep.subr.mxu0 %v25
  %184 = vmatpush1.msra.mxu0 %v24
  %185 = vmatprep.subr.mxu0 %v27
  %186 = vmatpush1.msra.mxu0 %v26
  %187 = vmatprep.subr.mxu0 0.0
  %188 = vmatpush1.msra.mxu0 0.0
  %189 = vmatprep.subr.mxu0 0.0
  %190 = vmatpush1.msra.mxu0 0.0
  %191 = vmatprep.subr.mxu0 0.0
  %192 = vmatpush1.msra.mxu0 0.0
  %193 = vmatprep.subr.mxu0 0.0
  %194 = vmatpush1.msra.mxu0 0.0
  %195 = vmatprep.subr.mxu0 0.0
  %196 = vmatpush1.msra.mxu0 0.0
  %197 = vmatprep.subr.mxu0 0.0
  %198 = vmatpush1.msra.mxu0 0.0
  %199 = vmatprep.subr.mxu0 0.0
  %200 = vmatpush1.msra.mxu0 0.0
  %201 = vmatprep.subr.mxu0 0.0
  %202 = vmatpush1.msra.mxu0 0.0
  %203 = vmatprep.subr.mxu0 0.0
  %204 = vmatpush1.msra.mxu0 0.0
  %205 = vmatprep.subr.mxu0 0.0
  %206 = vmatpush1.msra.mxu0 0.0
  %207 = vmatprep.subr.mxu0 0.0
  %208 = vmatpush1.msra.mxu0 0.0
  %209 = vmatprep.subr.mxu0 0.0
  %210 = vmatpush1.msra.mxu0 0.0
  %211 = vmatprep.subr.mxu0 0.0
  %212 = vmatpush1.msra.mxu0 0.0
  %213 = vmatprep.subr.mxu0 0.0
  %214 = vmatpush1.msra.mxu0 0.0
  %215 = vmatprep.subr.mxu0 0.0
  %216 = vmatpush1.msra.mxu0 0.0
  %217 = vmatprep.subr.mxu0 0.0
  %218 = vmatpush1.msra.mxu0 0.0
  %219 = vmatprep.subr.mxu0 0.0
  %220 = vmatpush1.msra.mxu0 0.0
  %221 = vmatprep.subr.mxu0 0.0
  %222 = vmatpush1.msra.mxu0 0.0
  %223 = vmatprep.subr.mxu0 0.0
  %224 = vmatpush1.msra.mxu0 0.0
  %225 = vmatprep.subr.mxu0 0.0
  %226 = vmatpush1.msra.mxu0 0.0
  %227 = vmatprep.subr.mxu0 0.0
  %228 = vmatpush1.msra.mxu0 0.0
  %229 = vmatprep.subr.mxu0 0.0
  %230 = vmatpush1.msra.mxu0 0.0
  %231 = vmatprep.subr.mxu0 0.0
  %232 = vmatpush1.msra.mxu0 0.0
  %233 = vmatprep.subr.mxu0 0.0
  %234 = vmatpush1.msra.mxu0 0.0
  %235 = vmatprep.subr.mxu0 0.0
  %236 = vmatpush1.msra.mxu0 0.0
  %237 = vmatprep.subr.mxu0 0.0
  %238 = vmatpush1.msra.mxu0 0.0
  %239 = vmatprep.subr.mxu0 0.0
  %240 = vmatpush1.msra.mxu0 0.0
  %241 = vmatprep.subr.mxu0 0.0
  %242 = vmatpush1.msra.mxu0 0.0
  %243 = vmatprep.mubr.f32.mxu0 0.0
  %244 = vmatmul.mubr.f32.gmra.mrb[0].mxu0 %v174
  %v245 = vpop.f32.mrb[0].mxu0
  %v246 = vadd.f32 %v166, %v245
  %v247 = vpop.f32.mrb[0].mxu0
  %v248 = vadd.f32 %v170, %v247
  %249 = vmatprep.mubr.f32.mxu0 0.0
  %250 = vmatmul.mubr.f32.gmra.mrb[0].mxu0 %v177
  %v251 = vpop.f32.mrb[0].mxu0
  %v252 = vadd.f32 %v166, %v251
  %v253 = vpop.f32.mrb[0].mxu0
  %v254 = vadd.f32 %v170, %v253
  %255 = vdwg.mxu0
  %258 = vrot.lane.b32.xlu0 %v246, 88
  %v259 = vpop.permute.xlu0 %258
  %260 = vrot.lane.b32.xlu0 %v252, 88
  %v261 = vpop.permute.xlu0 %260
  %262 = vrot.lane.b32.xlu0 %v246, 48
  %v263 = vpop.permute.xlu0 %262
  %264 = vrot.lane.b32.xlu0 %v252, 48
  %v265 = vpop.permute.xlu0 %264
  %268 = vrot.lane.b32.xlu0 %v246, 8
  %v269 = vpop.permute.xlu0 %268
  %270 = vrot.lane.b32.xlu0 %v248, 8
  %v271 = vpop.permute.xlu0 %270
  %272 = vrot.lane.b32.xlu0 %v252, 8
  %v273 = vpop.permute.xlu0 %272
  %274 = vrot.lane.b32.xlu0 %v254, 8
  %v275 = vpop.permute.xlu0 %274
  %vm276 = vcmask 64512
  %v277 = vsel %vm276, %v269, %v271
  %v278 = vsel %vm276, %v273, %v275
  %281 = vrot.lane.b32.xlu0 %v160, 96
  %v282 = vpop.permute.xlu0 %281
  %283 = vrot.lane.b32.xlu0 %v161, 96
  %v284 = vpop.permute.xlu0 %283
  %289 = vrot.lane.b32.xlu0 %v107, 96
  %v290 = vpop.permute.xlu0 %289
  %291 = vrot.lane.b32.xlu0 %v112, 96
  %v292 = vpop.permute.xlu0 %291
  %v295 = vsel %vm33, %v282, %v290
  %v296 = vsel %vm33, %v284, %v292
  %vm297 = vcmask 326656
  %v298 = vsel %vm297, %v246, 0
  %v300 = vsel %vm297, %v252, 0
  %v302 = vsel %vm297, %v259, 0
  %v304 = vsel %vm297, %v261, 0
  %v306 = vsel %vm297, %v263, 0
  %v308 = vsel %vm297, %v265, 0
  %v310 = vsel %vm297, %v277, 0
  %v312 = vsel %vm297, %v278, 0
  %v315 = vsel %vm297, %v295, 0
  %v318 = vsel %vm297, %v296, 0
  %320 = vmatprep.subr.mxu0 0.0
  %321 = vmatpush1.xpose.msra.mxu0 %v315
  %322 = vmatprep.subr.mxu0 0.0
  %323 = vmatpush1.xpose.msra.mxu0 %v318
  %324 = vmatprep.subr.mxu0 0.0
  %325 = vmatpush1.xpose.msra.mxu0 0.0
  %326 = vmatprep.subr.mxu0 0.0
  %327 = vmatpush1.xpose.msra.mxu0 0.0
  %328 = vmatprep.subr.mxu0 0.0
  %329 = vmatpush1.xpose.msra.mxu0 0.0
  %330 = vmatprep.subr.mxu0 0.0
  %331 = vmatpush1.xpose.msra.mxu0 0.0
  %332 = vmatprep.subr.mxu0 0.0
  %333 = vmatpush1.xpose.msra.mxu0 0.0
  %334 = vmatprep.subr.mxu0 0.0
  %335 = vmatpush1.xpose.msra.mxu0 0.0
  %336 = vmatprep.subr.mxu0 0.0
  %337 = vmatpush1.xpose.msra.mxu0 0.0
  %338 = vmatprep.subr.mxu0 0.0
  %339 = vmatpush1.xpose.msra.mxu0 0.0
  %340 = vmatprep.subr.mxu0 0.0
  %341 = vmatpush1.xpose.msra.mxu0 0.0
  %342 = vmatprep.subr.mxu0 0.0
  %343 = vmatpush1.xpose.msra.mxu0 0.0
  %344 = vmatprep.subr.mxu0 0.0
  %345 = vmatpush1.xpose.msra.mxu0 0.0
  %346 = vmatprep.subr.mxu0 0.0
  %347 = vmatpush1.xpose.msra.mxu0 0.0
  %348 = vmatprep.subr.mxu0 0.0
  %349 = vmatpush1.xpose.msra.mxu0 0.0
  %350 = vmatprep.subr.mxu0 0.0
  %351 = vmatpush1.xpose.msra.mxu0 0.0
  %352 = vmatprep.subr.mxu0 0.0
  %353 = vmatpush1.xpose.msra.mxu0 0.0
  %354 = vmatprep.subr.mxu0 0.0
  %355 = vmatpush1.xpose.msra.mxu0 0.0
  %356 = vmatprep.subr.mxu0 0.0
  %357 = vmatpush1.xpose.msra.mxu0 0.0
  %358 = vmatprep.subr.mxu0 0.0
  %359 = vmatpush1.xpose.msra.mxu0 0.0
  %360 = vmatprep.subr.mxu0 0.0
  %361 = vmatpush1.xpose.msra.mxu0 0.0
  %362 = vmatprep.subr.mxu0 0.0
  %363 = vmatpush1.xpose.msra.mxu0 0.0
  %364 = vmatprep.subr.mxu0 0.0
  %365 = vmatpush1.xpose.msra.mxu0 0.0
  %366 = vmatprep.subr.mxu0 0.0
  %367 = vmatpush1.xpose.msra.mxu0 0.0
  %368 = vmatprep.subr.mxu0 0.0
  %369 = vmatpush1.xpose.msra.mxu0 0.0
  %370 = vmatprep.subr.mxu0 0.0
  %371 = vmatpush1.xpose.msra.mxu0 0.0
  %372 = vmatprep.subr.mxu0 0.0
  %373 = vmatpush1.xpose.msra.mxu0 0.0
  %374 = vmatprep.subr.mxu0 0.0
  %375 = vmatpush1.xpose.msra.mxu0 0.0
  %376 = vmatprep.subr.mxu0 0.0
  %377 = vmatpush1.xpose.msra.mxu0 0.0
  %378 = vmatprep.subr.mxu0 0.0
  %379 = vmatpush1.xpose.msra.mxu0 0.0
  %380 = vmatprep.subr.mxu0 0.0
  %381 = vmatpush1.xpose.msra.mxu0 0.0
  %382 = vmatprep.subr.mxu0 0.0
  %383 = vmatpush1.xpose.msra.mxu0 0.0
  %384 = vmatprep.mubr.f32.mxu0 0.0
  %385 = vmatmul.mubr.f32.gmra.mrb[0].mxu0 %v298
  %v386 = vpop.f32.mrb[0].mxu0
  %v387 = vadd.f32 0.0, %v386
  %v388 = vpop.f32.mrb[0].mxu0
  %389 = vmatprep.mubr.f32.mxu0 0.0
  %390 = vmatmul.mubr.f32.gmra.mrb[0].mxu0 %v300
  %v391 = vpop.f32.mrb[0].mxu0
  %v392 = vadd.f32 0.0, %v391
  %v393 = vpop.f32.mrb[0].mxu0
  %394 = vmatprep.mubr.f32.mxu0 0.0
  %395 = vmatmul.mubr.f32.gmra.mrb[0].mxu0 %v302
  %v396 = vpop.f32.mrb[0].mxu0
  %v397 = vadd.f32 0.0, %v396
  %v398 = vpop.f32.mrb[0].mxu0
  %399 = vmatprep.mubr.f32.mxu0 0.0
  %400 = vmatmul.mubr.f32.gmra.mrb[0].mxu0 %v304
  %v401 = vpop.f32.mrb[0].mxu0
  %v402 = vadd.f32 0.0, %v401
  %v403 = vpop.f32.mrb[0].mxu0
  %404 = vmatprep.mubr.f32.mxu0 0.0
  %405 = vmatmul.mubr.f32.gmra.mrb[0].mxu0 %v306
  %v406 = vpop.f32.mrb[0].mxu0
  %v407 = vadd.f32 0.0, %v406
  %v408 = vpop.f32.mrb[0].mxu0
  %409 = vmatprep.mubr.f32.mxu0 0.0
  %410 = vmatmul.mubr.f32.gmra.mrb[0].mxu0 %v308
  %v411 = vpop.f32.mrb[0].mxu0
  %v412 = vadd.f32 0.0, %v411
  %v413 = vpop.f32.mrb[0].mxu0
  %414 = vmatprep.mubr.f32.mxu0 0.0
  %415 = vmatmul.mubr.f32.gmra.mrb[0].mxu0 %v310
  %v416 = vpop.f32.mrb[0].mxu0
  %v417 = vadd.f32 0.0, %v416
  %v418 = vpop.f32.mrb[0].mxu0
  %419 = vmatprep.mubr.f32.mxu0 0.0
  %420 = vmatmul.mubr.f32.gmra.mrb[0].mxu0 %v312
  %v421 = vpop.f32.mrb[0].mxu0
  %v422 = vadd.f32 0.0, %v421
  %v423 = vpop.f32.mrb[0].mxu0
  %424 = vdwg.mxu0
  %v425 = vmul.f32 %v387, 0.25
  %v426 = vmul.f32 %v392, 0.25
  %v427 = vmul.f32 %v397, 0.25
  %v428 = vmul.f32 %v402, 0.25
  %v429 = vmul.f32 %v407, 0.25
  %v430 = vmul.f32 %v412, 0.25
  %v431 = vmul.f32 %v417, 0.25
  %v432 = vmul.f32 %v422, 0.25
  %v433 = vadd.f32 %v425, %v31
  %v434 = vadd.f32 %v426, %v32
  %v435 = vadd.f32 %v427, %v31
  %v436 = vadd.f32 %v428, %v32
  %v437 = vadd.f32 %v429, %v31
  %v438 = vadd.f32 %v430, %v32
  %v439 = vadd.f32 %v431, %v31
  %v440 = vadd.f32 %v432, %v32
  %vm441 = vcmask 130048
  %v442 = vsel %vm441, %v433, -inf
  %443 = vmax.xlane.f32.xlu0 %v442
  %v444 = vpop.xlane.xlu0 %443
  %v445 = vsel %vm441, %v434, -inf
  %446 = vmax.xlane.f32.xlu0 %v445
  %v447 = vpop.xlane.xlu0 %446
  %v448 = vsel %vm441, %v435, -inf
  %449 = vmax.xlane.f32.xlu0 %v448
  %v450 = vpop.xlane.xlu0 %449
  %v451 = vsel %vm441, %v436, -inf
  %452 = vmax.xlane.f32.xlu0 %v451
  %v453 = vpop.xlane.xlu0 %452
  %v454 = vsel %vm441, %v437, -inf
  %455 = vmax.xlane.f32.xlu0 %v454
  %v456 = vpop.xlane.xlu0 %455
  %v457 = vsel %vm441, %v438, -inf
  %458 = vmax.xlane.f32.xlu0 %v457
  %v459 = vpop.xlane.xlu0 %458
  %v460 = vsel %vm441, %v439, -inf
  %461 = vmax.xlane.f32.xlu0 %v460
  %v462 = vpop.xlane.xlu0 %461
  %v463 = vsel %vm441, %v440, -inf
  %464 = vmax.xlane.f32.xlu0 %v463
  %v465 = vpop.xlane.xlu0 %464
  %v466 = vsub.f32 %v433, %v444
  %v467 = vsub.f32 %v434, %v447
  %v468 = vsub.f32 %v435, %v450
  %v469 = vsub.f32 %v436, %v453
  %v470 = vsub.f32 %v437, %v456
  %v471 = vsub.f32 %v438, %v459
  %v472 = vsub.f32 %v439, %v462
  %v473 = vsub.f32 %v440, %v465
  %v474 = vmul.f32 %v466, 1.442695
  %v475 = vpow.pop %v474
  %v476 = vmul.f32 %v467, 1.442695
  %v477 = vpow.pop %v476
  %v478 = vmul.f32 %v468, 1.442695
  %v479 = vpow.pop %v478
  %v480 = vmul.f32 %v469, 1.442695
  %v481 = vpow.pop %v480
  %v482 = vmul.f32 %v470, 1.442695
  %v483 = vpow.pop %v482
  %v484 = vmul.f32 %v471, 1.442695
  %v485 = vpow.pop %v484
  %v486 = vmul.f32 %v472, 1.442695
  %v487 = vpow.pop %v486
  %v488 = vmul.f32 %v473, 1.442695
  %v489 = vpow.pop %v488
  %v490 = vsel %vm441, %v475, 0.0
  %491 = vadd.xlane.f32.xlu0 %v490
  %v492 = vpop.xlane.xlu0 %491
  %v493 = vsel %vm441, %v477, 0.0
  %494 = vadd.xlane.f32.xlu0 %v493
  %v495 = vpop.xlane.xlu0 %494
  %v496 = vsel %vm441, %v479, 0.0
  %497 = vadd.xlane.f32.xlu0 %v496
  %v498 = vpop.xlane.xlu0 %497
  %v499 = vsel %vm441, %v481, 0.0
  %500 = vadd.xlane.f32.xlu0 %v499
  %v501 = vpop.xlane.xlu0 %500
  %v502 = vsel %vm441, %v483, 0.0
  %503 = vadd.xlane.f32.xlu0 %v502
  %v504 = vpop.xlane.xlu0 %503
  %v505 = vsel %vm441, %v485, 0.0
  %506 = vadd.xlane.f32.xlu0 %v505
  %v507 = vpop.xlane.xlu0 %506
  %v508 = vsel %vm441, %v487, 0.0
  %509 = vadd.xlane.f32.xlu0 %v508
  %v510 = vpop.xlane.xlu0 %509
  %v511 = vsel %vm441, %v489, 0.0
  %512 = vadd.xlane.f32.xlu0 %v511
  %v513 = vpop.xlane.xlu0 %512
  %v514 = vrcp.pop %v492
  %v515 = vmul.f32 %v475, %v514
  %v516 = vrcp.pop %v495
  %v517 = vmul.f32 %v477, %v516
  %v518 = vrcp.pop %v498
  %v519 = vmul.f32 %v479, %v518
  %v520 = vrcp.pop %v501
  %v521 = vmul.f32 %v481, %v520
  %v522 = vrcp.pop %v504
  %v523 = vmul.f32 %v483, %v522
  %v524 = vrcp.pop %v507
  %v525 = vmul.f32 %v485, %v524
  %v526 = vrcp.pop %v510
  %v527 = vmul.f32 %v487, %v526
  %v528 = vrcp.pop %v513
  %v529 = vmul.f32 %v489, %v528
  %v531 = vsel %vm441, %v515, 0
  %v534 = vsel %vm441, %v517, 0
  %v537 = vsel %vm441, %v519, 0
  %v540 = vsel %vm441, %v521, 0
  %v543 = vsel %vm441, %v523, 0
  %v546 = vsel %vm441, %v525, 0
  %v549 = vsel %vm441, %v527, 0
  %v552 = vsel %vm441, %v529, 0
  %554 = vmatprep.subr.mxu0 0.0
  %555 = vmatpush1.msra.mxu0 %v282
  %556 = vmatprep.subr.mxu0 0.0
  %557 = vmatpush1.msra.mxu0 %v284
  %558 = vmatprep.subr.mxu0 0.0
  %559 = vmatpush1.msra.mxu0 0.0
  %560 = vmatprep.subr.mxu0 0.0
  %561 = vmatpush1.msra.mxu0 0.0
  %562 = vmatprep.subr.mxu0 0.0
  %563 = vmatpush1.msra.mxu0 0.0
  %564 = vmatprep.subr.mxu0 0.0
  %565 = vmatpush1.msra.mxu0 0.0
  %566 = vmatprep.subr.mxu0 0.0
  %567 = vmatpush1.msra.mxu0 0.0
  %568 = vmatprep.subr.mxu0 0.0
  %569 = vmatpush1.msra.mxu0 0.0
  %570 = vmatprep.subr.mxu0 0.0
  %571 = vmatpush1.msra.mxu0 0.0
  %572 = vmatprep.subr.mxu0 0.0
  %573 = vmatpush1.msra.mxu0 0.0
  %574 = vmatprep.subr.mxu0 0.0
  %575 = vmatpush1.msra.mxu0 0.0
  %576 = vmatprep.subr.mxu0 0.0
  %577 = vmatpush1.msra.mxu0 0.0
  %578 = vmatprep.subr.mxu0 0.0
  %579 = vmatpush1.msra.mxu0 0.0
  %580 = vmatprep.subr.mxu0 0.0
  %581 = vmatpush1.msra.mxu0 0.0
  %582 = vmatprep.subr.mxu0 0.0
  %583 = vmatpush1.msra.mxu0 0.0
  %584 = vmatprep.subr.mxu0 0.0
  %585 = vmatpush1.msra.mxu0 0.0
  %586 = vmatprep.subr.mxu0 0.0
  %587 = vmatpush1.msra.mxu0 0.0
  %588 = vmatprep.subr.mxu0 0.0
  %589 = vmatpush1.msra.mxu0 0.0
  %590 = vmatprep.subr.mxu0 0.0
  %591 = vmatpush1.msra.mxu0 0.0
  %592 = vmatprep.subr.mxu0 0.0
  %593 = vmatpush1.msra.mxu0 0.0
  %594 = vmatprep.subr.mxu0 0.0
  %595 = vmatpush1.msra.mxu0 0.0
  %596 = vmatprep.subr.mxu0 0.0
  %597 = vmatpush1.msra.mxu0 0.0
  %598 = vmatprep.subr.mxu0 0.0
  %599 = vmatpush1.msra.mxu0 0.0
  %600 = vmatprep.subr.mxu0 0.0
  %601 = vmatpush1.msra.mxu0 0.0
  %602 = vmatprep.subr.mxu0 0.0
  %603 = vmatpush1.msra.mxu0 0.0
  %604 = vmatprep.subr.mxu0 0.0
  %605 = vmatpush1.msra.mxu0 0.0
  %606 = vmatprep.subr.mxu0 0.0
  %607 = vmatpush1.msra.mxu0 0.0
  %608 = vmatprep.subr.mxu0 0.0
  %609 = vmatpush1.msra.mxu0 0.0
  %610 = vmatprep.subr.mxu0 0.0
  %611 = vmatpush1.msra.mxu0 0.0
  %612 = vmatprep.subr.mxu0 0.0
  %613 = vmatpush1.msra.mxu0 0.0
  %614 = vmatprep.subr.mxu0 0.0
  %615 = vmatpush1.msra.mxu0 0.0
  %616 = vmatprep.subr.mxu0 0.0
  %617 = vmatpush1.msra.mxu0 0.0
  %618 = vmatprep.mubr.f32.mxu0 0.0
  %619 = vmatmul.mubr.f32.gmra.mrb[0].mxu0 %v531
  %v620 = vpop.f32.mrb[0].mxu0
  %v621 = vadd.f32 0.0, %v620
  %v622 = vpop.f32.mrb[0].mxu0
  %623 = vmatprep.mubr.f32.mxu0 0.0
  %624 = vmatmul.mubr.f32.gmra.mrb[0].mxu0 %v534
  %v625 = vpop.f32.mrb[0].mxu0
  %v626 = vadd.f32 0.0, %v625
  %v627 = vpop.f32.mrb[0].mxu0
  %628 = vmatprep.mubr.f32.mxu0 0.0
  %629 = vmatmul.mubr.f32.gmra.mrb[0].mxu0 %v537
  %v630 = vpop.f32.mrb[0].mxu0
  %v631 = vadd.f32 0.0, %v630
  %v632 = vpop.f32.mrb[0].mxu0
  %633 = vmatprep.mubr.f32.mxu0 0.0
  %634 = vmatmul.mubr.f32.gmra.mrb[0].mxu0 %v540
  %v635 = vpop.f32.mrb[0].mxu0
  %v636 = vadd.f32 0.0, %v635
  %v637 = vpop.f32.mrb[0].mxu0
  %638 = vmatprep.mubr.f32.mxu0 0.0
  %639 = vmatmul.mubr.f32.gmra.mrb[0].mxu0 %v543
  %v640 = vpop.f32.mrb[0].mxu0
  %v641 = vadd.f32 0.0, %v640
  %v642 = vpop.f32.mrb[0].mxu0
  %643 = vmatprep.mubr.f32.mxu0 0.0
  %644 = vmatmul.mubr.f32.gmra.mrb[0].mxu0 %v546
  %v645 = vpop.f32.mrb[0].mxu0
  %v646 = vadd.f32 0.0, %v645
  %v647 = vpop.f32.mrb[0].mxu0
  %648 = vmatprep.mubr.f32.mxu0 0.0
  %649 = vmatmul.mubr.f32.gmra.mrb[0].mxu0 %v549
  %v650 = vpop.f32.mrb[0].mxu0
  %v651 = vadd.f32 0.0, %v650
  %v652 = vpop.f32.mrb[0].mxu0
  %653 = vmatprep.mubr.f32.mxu0 0.0
  %654 = vmatmul.mubr.f32.gmra.mrb[0].mxu0 %v552
  %v655 = vpop.f32.mrb[0].mxu0
  %v656 = vadd.f32 0.0, %v655
  %v657 = vpop.f32.mrb[0].mxu0
  %658 = vdwg.mxu0
  %v659 = vld [vmem:[%s1 + $0xa0] sm:$0xff]
  %v660 = vld [vmem:[%s1 + $0xb0] sm:$0xff]
  %v661 = vld [vmem:[%s1 + $0xc0] sm:$0xff]
  %v662 = vld [vmem:[%s1 + $0xd0] sm:$0xff]
  %v664 = vsel %vm33, %v621, 0
  %v667 = vsel %vm33, %v626, 0
  %669 = vmatprep.subr.mxu0 0.0
  %670 = vmatpush1.msra.mxu0 %v659
  %671 = vmatprep.subr.mxu0 0.0
  %672 = vmatpush1.msra.mxu0 %v660
  %673 = vmatprep.subr.mxu0 0.0
  %674 = vmatpush1.msra.mxu0 %v661
  %675 = vmatprep.subr.mxu0 0.0
  %676 = vmatpush1.msra.mxu0 %v662
  %677 = vmatprep.subr.mxu0 0.0
  %678 = vmatpush1.msra.mxu0 0.0
  %679 = vmatprep.subr.mxu0 0.0
  %680 = vmatpush1.msra.mxu0 0.0
  %681 = vmatprep.subr.mxu0 0.0
  %682 = vmatpush1.msra.mxu0 0.0
  %683 = vmatprep.subr.mxu0 0.0
  %684 = vmatpush1.msra.mxu0 0.0
  %685 = vmatprep.subr.mxu0 0.0
  %686 = vmatpush1.msra.mxu0 0.0
  %687 = vmatprep.subr.mxu0 0.0
  %688 = vmatpush1.msra.mxu0 0.0
  %689 = vmatprep.subr.mxu0 0.0
  %690 = vmatpush1.msra.mxu0 0.0
  %691 = vmatprep.subr.mxu0 0.0
  %692 = vmatpush1.msra.mxu0 0.0
  %693 = vmatprep.subr.mxu0 0.0
  %694 = vmatpush1.msra.mxu0 0.0
  %695 = vmatprep.subr.mxu0 0.0
  %696 = vmatpush1.msra.mxu0 0.0
  %697 = vmatprep.subr.mxu0 0.0
  %698 = vmatpush1.msra.mxu0 0.0
  %699 = vmatprep.subr.mxu0 0.0
  %700 = vmatpush1.msra.mxu0 0.0
  %701 = vmatprep.subr.mxu0 0.0
  %702 = vmatpush1.msra.mxu0 0.0
  %703 = vmatprep.subr.mxu0 0.0
  %704 = vmatpush1.msra.mxu0 0.0
  %705 = vmatprep.subr.mxu0 0.0
  %706 = vmatpush1.msra.mxu0 0.0
  %707 = vmatprep.subr.mxu0 0.0
  %708 = vmatpush1.msra.mxu0 0.0
  %709 = vmatprep.subr.mxu0 0.0
  %710 = vmatpush1.msra.mxu0 0.0
  %711 = vmatprep.subr.mxu0 0.0
  %712 = vmatpush1.msra.mxu0 0.0
  %713 = vmatprep.subr.mxu0 0.0
  %714 = vmatpush1.msra.mxu0 0.0
  %715 = vmatprep.subr.mxu0 0.0
  %716 = vmatpush1.msra.mxu0 0.0
  %717 = vmatprep.subr.mxu0 0.0
  %718 = vmatpush1.msra.mxu0 0.0
  %719 = vmatprep.subr.mxu0 0.0
  %720 = vmatpush1.msra.mxu0 0.0
  %721 = vmatprep.subr.mxu0 0.0
  %722 = vmatpush1.msra.mxu0 0.0
  %723 = vmatprep.subr.mxu0 0.0
  %724 = vmatpush1.msra.mxu0 0.0
  %725 = vmatprep.subr.mxu0 0.0
  %726 = vmatpush1.msra.mxu0 0.0
  %727 = vmatprep.subr.mxu0 0.0
  %728 = vmatpush1.msra.mxu0 0.0
  %729 = vmatprep.subr.mxu0 0.0
  %730 = vmatpush1.msra.mxu0 0.0
  %731 = vmatprep.subr.mxu0 0.0
  %732 = vmatpush1.msra.mxu0 0.0
  %733 = vmatprep.mubr.f32.mxu0 0.0
  %734 = vmatmul.mubr.f32.gmra.mrb[0].mxu0 %v664
  %v735 = vpop.f32.mrb[0].mxu0
  %v736 = vadd.f32 0.0, %v735
  %v737 = vpop.f32.mrb[0].mxu0
  %738 = vmatprep.mubr.f32.mxu0 0.0
  %739 = vmatmul.mubr.f32.gmra.mrb[0].mxu0 %v667
  %v740 = vpop.f32.mrb[0].mxu0
  %v741 = vadd.f32 0.0, %v740
  %v742 = vpop.f32.mrb[0].mxu0
  %743 = vdwg.mxu0
  %v744 = vadd.f32 %v30, %v736
  %v745 = vadd.f32 %v30, %v741
  %v746 = vld [vmem:[%s1 + $0xe0] sm:$0xff]
  %v747 = vld [vmem:[%s1 + $0xf0] sm:$0xff]
  %v748 = vld [vmem:[%s1 + $0x100] sm:$0xff]
  %v749 = vld [vmem:[%s1 + $0x110] sm:$0xff]
  %v751 = vsel %vm33, %v631, 0
  %v754 = vsel %vm33, %v636, 0
  %756 = vmatprep.subr.mxu0 0.0
  %757 = vmatpush1.msra.mxu0 %v746
  %758 = vmatprep.subr.mxu0 0.0
  %759 = vmatpush1.msra.mxu0 %v747
  %760 = vmatprep.subr.mxu0 0.0
  %761 = vmatpush1.msra.mxu0 %v748
  %762 = vmatprep.subr.mxu0 0.0
  %763 = vmatpush1.msra.mxu0 %v749
  %764 = vmatprep.subr.mxu0 0.0
  %765 = vmatpush1.msra.mxu0 0.0
  %766 = vmatprep.subr.mxu0 0.0
  %767 = vmatpush1.msra.mxu0 0.0
  %768 = vmatprep.subr.mxu0 0.0
  %769 = vmatpush1.msra.mxu0 0.0
  %770 = vmatprep.subr.mxu0 0.0
  %771 = vmatpush1.msra.mxu0 0.0
  %772 = vmatprep.subr.mxu0 0.0
  %773 = vmatpush1.msra.mxu0 0.0
  %774 = vmatprep.subr.mxu0 0.0
  %775 = vmatpush1.msra.mxu0 0.0
  %776 = vmatprep.subr.mxu0 0.0
  %777 = vmatpush1.msra.mxu0 0.0
  %778 = vmatprep.subr.mxu0 0.0
  %779 = vmatpush1.msra.mxu0 0.0
  %780 = vmatprep.subr.mxu0 0.0
  %781 = vmatpush1.msra.mxu0 0.0
  %782 = vmatprep.subr.mxu0 0.0
  %783 = vmatpush1.msra.mxu0 0.0
  %784 = vmatprep.subr.mxu0 0.0
  %785 = vmatpush1.msra.mxu0 0.0
  %786 = vmatprep.subr.mxu0 0.0
  %787 = vmatpush1.msra.mxu0 0.0
  %788 = vmatprep.subr.mxu0 0.0
  %789 = vmatpush1.msra.mxu0 0.0
  %790 = vmatprep.subr.mxu0 0.0
  %791 = vmatpush1.msra.mxu0 0.0
  %792 = vmatprep.subr.mxu0 0.0
  %793 = vmatpush1.msra.mxu0 0.0
  %794 = vmatprep.subr.mxu0 0.0
  %795 = vmatpush1.msra.mxu0 0.0
  %796 = vmatprep.subr.mxu0 0.0
  %797 = vmatpush1.msra.mxu0 0.0
  %798 = vmatprep.subr.mxu0 0.0
  %799 = vmatpush1.msra.mxu0 0.0
  %800 = vmatprep.subr.mxu0 0.0
  %801 = vmatpush1.msra.mxu0 0.0
  %802 = vmatprep.subr.mxu0 0.0
  %803 = vmatpush1.msra.mxu0 0.0
  %804 = vmatprep.subr.mxu0 0.0
  %805 = vmatpush1.msra.mxu0 0.0
  %806 = vmatprep.subr.mxu0 0.0
  %807 = vmatpush1.msra.mxu0 0.0
  %808 = vmatprep.subr.mxu0 0.0
  %809 = vmatpush1.msra.mxu0 0.0
  %810 = vmatprep.subr.mxu0 0.0
  %811 = vmatpush1.msra.mxu0 0.0
  %812 = vmatprep.subr.mxu0 0.0
  %813 = vmatpush1.msra.mxu0 0.0
  %814 = vmatprep.subr.mxu0 0.0
  %815 = vmatpush1.msra.mxu0 0.0
  %816 = vmatprep.subr.mxu0 0.0
  %817 = vmatpush1.msra.mxu0 0.0
  %818 = vmatprep.subr.mxu0 0.0
  %819 = vmatpush1.msra.mxu0 0.0
  %820 = vmatprep.mubr.f32.mxu0 0.0
  %821 = vmatmul.mubr.f32.gmra.mrb[0].mxu0 %v751
  %v822 = vpop.f32.mrb[0].mxu0
  %v823 = vadd.f32 0.0, %v822
  %v824 = vpop.f32.mrb[0].mxu0
  %825 = vmatprep.mubr.f32.mxu0 0.0
  %826 = vmatmul.mubr.f32.gmra.mrb[0].mxu0 %v754
  %v827 = vpop.f32.mrb[0].mxu0
  %v828 = vadd.f32 0.0, %v827
  %v829 = vpop.f32.mrb[0].mxu0
  %830 = vdwg.mxu0
  %v831 = vadd.f32 %v744, %v823
  %v832 = vadd.f32 %v745, %v828
  %v833 = vld [vmem:[%s1 + $0x120] sm:$0xff]
  %v834 = vld [vmem:[%s1 + $0x130] sm:$0xff]
  %v835 = vld [vmem:[%s1 + $0x140] sm:$0xff]
  %v836 = vld [vmem:[%s1 + $0x150] sm:$0xff]
  %v838 = vsel %vm33, %v641, 0
  %v841 = vsel %vm33, %v646, 0
  %843 = vmatprep.subr.mxu0 0.0
  %844 = vmatpush1.msra.mxu0 %v833
  %845 = vmatprep.subr.mxu0 0.0
  %846 = vmatpush1.msra.mxu0 %v834
  %847 = vmatprep.subr.mxu0 0.0
  %848 = vmatpush1.msra.mxu0 %v835
  %849 = vmatprep.subr.mxu0 0.0
  %850 = vmatpush1.msra.mxu0 %v836
  %851 = vmatprep.subr.mxu0 0.0
  %852 = vmatpush1.msra.mxu0 0.0
  %853 = vmatprep.subr.mxu0 0.0
  %854 = vmatpush1.msra.mxu0 0.0
  %855 = vmatprep.subr.mxu0 0.0
  %856 = vmatpush1.msra.mxu0 0.0
  %857 = vmatprep.subr.mxu0 0.0
  %858 = vmatpush1.msra.mxu0 0.0
  %859 = vmatprep.subr.mxu0 0.0
  %860 = vmatpush1.msra.mxu0 0.0
  %861 = vmatprep.subr.mxu0 0.0
  %862 = vmatpush1.msra.mxu0 0.0
  %863 = vmatprep.subr.mxu0 0.0
  %864 = vmatpush1.msra.mxu0 0.0
  %865 = vmatprep.subr.mxu0 0.0
  %866 = vmatpush1.msra.mxu0 0.0
  %867 = vmatprep.subr.mxu0 0.0
  %868 = vmatpush1.msra.mxu0 0.0
  %869 = vmatprep.subr.mxu0 0.0
  %870 = vmatpush1.msra.mxu0 0.0
  %871 = vmatprep.subr.mxu0 0.0
  %872 = vmatpush1.msra.mxu0 0.0
  %873 = vmatprep.subr.mxu0 0.0
  %874 = vmatpush1.msra.mxu0 0.0
  %875 = vmatprep.subr.mxu0 0.0
  %876 = vmatpush1.msra.mxu0 0.0
  %877 = vmatprep.subr.mxu0 0.0
  %878 = vmatpush1.msra.mxu0 0.0
  %879 = vmatprep.subr.mxu0 0.0
  %880 = vmatpush1.msra.mxu0 0.0
  %881 = vmatprep.subr.mxu0 0.0
  %882 = vmatpush1.msra.mxu0 0.0
  %883 = vmatprep.subr.mxu0 0.0
  %884 = vmatpush1.msra.mxu0 0.0
  %885 = vmatprep.subr.mxu0 0.0
  %886 = vmatpush1.msra.mxu0 0.0
  %887 = vmatprep.subr.mxu0 0.0
  %888 = vmatpush1.msra.mxu0 0.0
  %889 = vmatprep.subr.mxu0 0.0
  %890 = vmatpush1.msra.mxu0 0.0
  %891 = vmatprep.subr.mxu0 0.0
  %892 = vmatpush1.msra.mxu0 0.0
  %893 = vmatprep.subr.mxu0 0.0
  %894 = vmatpush1.msra.mxu0 0.0
  %895 = vmatprep.subr.mxu0 0.0
  %896 = vmatpush1.msra.mxu0 0.0
  %897 = vmatprep.subr.mxu0 0.0
  %898 = vmatpush1.msra.mxu0 0.0
  %899 = vmatprep.subr.mxu0 0.0
  %900 = vmatpush1.msra.mxu0 0.0
  %901 = vmatprep.subr.mxu0 0.0
  %902 = vmatpush1.msra.mxu0 0.0
  %903 = vmatprep.subr.mxu0 0.0
  %904 = vmatpush1.msra.mxu0 0.0
  %905 = vmatprep.subr.mxu0 0.0
  %906 = vmatpush1.msra.mxu0 0.0
  %907 = vmatprep.mubr.f32.mxu0 0.0
  %908 = vmatmul.mubr.f32.gmra.mrb[0].mxu0 %v838
  %v909 = vpop.f32.mrb[0].mxu0
  %v910 = vadd.f32 0.0, %v909
  %v911 = vpop.f32.mrb[0].mxu0
  %912 = vmatprep.mubr.f32.mxu0 0.0
  %913 = vmatmul.mubr.f32.gmra.mrb[0].mxu0 %v841
  %v914 = vpop.f32.mrb[0].mxu0
  %v915 = vadd.f32 0.0, %v914
  %v916 = vpop.f32.mrb[0].mxu0
  %917 = vdwg.mxu0
  %v918 = vadd.f32 %v831, %v910
  %v919 = vadd.f32 %v832, %v915
  %v920 = vld [vmem:[%s1 + $0x160] sm:$0xff]
  %v921 = vld [vmem:[%s1 + $0x170] sm:$0xff]
  %v922 = vld [vmem:[%s1 + $0x180] sm:$0xff]
  %v923 = vld [vmem:[%s1 + $0x190] sm:$0xff]
  %v925 = vsel %vm33, %v651, 0
  %v928 = vsel %vm33, %v656, 0
  %930 = vmatprep.subr.mxu0 0.0
  %931 = vmatpush1.msra.mxu0 %v920
  %932 = vmatprep.subr.mxu0 0.0
  %933 = vmatpush1.msra.mxu0 %v921
  %934 = vmatprep.subr.mxu0 0.0
  %935 = vmatpush1.msra.mxu0 %v922
  %936 = vmatprep.subr.mxu0 0.0
  %937 = vmatpush1.msra.mxu0 %v923
  %938 = vmatprep.subr.mxu0 0.0
  %939 = vmatpush1.msra.mxu0 0.0
  %940 = vmatprep.subr.mxu0 0.0
  %941 = vmatpush1.msra.mxu0 0.0
  %942 = vmatprep.subr.mxu0 0.0
  %943 = vmatpush1.msra.mxu0 0.0
  %944 = vmatprep.subr.mxu0 0.0
  %945 = vmatpush1.msra.mxu0 0.0
  %946 = vmatprep.subr.mxu0 0.0
  %947 = vmatpush1.msra.mxu0 0.0
  %948 = vmatprep.subr.mxu0 0.0
  %949 = vmatpush1.msra.mxu0 0.0
  %950 = vmatprep.subr.mxu0 0.0
  %951 = vmatpush1.msra.mxu0 0.0
  %952 = vmatprep.subr.mxu0 0.0
  %953 = vmatpush1.msra.mxu0 0.0
  %954 = vmatprep.subr.mxu0 0.0
  %955 = vmatpush1.msra.mxu0 0.0
  %956 = vmatprep.subr.mxu0 0.0
  %957 = vmatpush1.msra.mxu0 0.0
  %958 = vmatprep.subr.mxu0 0.0
  %959 = vmatpush1.msra.mxu0 0.0
  %960 = vmatprep.subr.mxu0 0.0
  %961 = vmatpush1.msra.mxu0 0.0
  %962 = vmatprep.subr.mxu0 0.0
  %963 = vmatpush1.msra.mxu0 0.0
  %964 = vmatprep.subr.mxu0 0.0
  %965 = vmatpush1.msra.mxu0 0.0
  %966 = vmatprep.subr.mxu0 0.0
  %967 = vmatpush1.msra.mxu0 0.0
  %968 = vmatprep.subr.mxu0 0.0
  %969 = vmatpush1.msra.mxu0 0.0
  %970 = vmatprep.subr.mxu0 0.0
  %971 = vmatpush1.msra.mxu0 0.0
  %972 = vmatprep.subr.mxu0 0.0
  %973 = vmatpush1.msra.mxu0 0.0
  %974 = vmatprep.subr.mxu0 0.0
  %975 = vmatpush1.msra.mxu0 0.0
  %976 = vmatprep.subr.mxu0 0.0
  %977 = vmatpush1.msra.mxu0 0.0
  %978 = vmatprep.subr.mxu0 0.0
  %979 = vmatpush1.msra.mxu0 0.0
  %980 = vmatprep.subr.mxu0 0.0
  %981 = vmatpush1.msra.mxu0 0.0
  %982 = vmatprep.subr.mxu0 0.0
  %983 = vmatpush1.msra.mxu0 0.0
  %984 = vmatprep.subr.mxu0 0.0
  %985 = vmatpush1.msra.mxu0 0.0
  %986 = vmatprep.subr.mxu0 0.0
  %987 = vmatpush1.msra.mxu0 0.0
  %988 = vmatprep.subr.mxu0 0.0
  %989 = vmatpush1.msra.mxu0 0.0
  %990 = vmatprep.subr.mxu0 0.0
  %991 = vmatpush1.msra.mxu0 0.0
  %992 = vmatprep.subr.mxu0 0.0
  %993 = vmatpush1.msra.mxu0 0.0
  %994 = vmatprep.mubr.f32.mxu0 0.0
  %995 = vmatmul.mubr.f32.gmra.mrb[0].mxu0 %v925
  %v996 = vpop.f32.mrb[0].mxu0
  %v997 = vadd.f32 0.0, %v996
  %v998 = vpop.f32.mrb[0].mxu0
  %999 = vmatprep.mubr.f32.mxu0 0.0
  %1000 = vmatmul.mubr.f32.gmra.mrb[0].mxu0 %v928
  %v1001 = vpop.f32.mrb[0].mxu0
  %v1002 = vadd.f32 0.0, %v1001
  %v1003 = vpop.f32.mrb[0].mxu0
  %1004 = vdwg.mxu0
  %v1005 = vadd.f32 %v918, %v997
  %v1006 = vadd.f32 %v919, %v1002
  %1007 = vst [vmem:[%s2] sm:$0xff] %v1005
  %1008 = vst [vmem:[%s2 + $0x8] sm:$0xff] %v1006
  // Predicated region
  $region10: #{mla_forward.1} parent=0 // pred_check
    _
  $region11: #{mla_forward.1} parent=0 // pred_check_branch
    %1010 = sbr.rel (0) target = $region13
  $region12: #{mla_forward.1} parent=0 // pred_region
    _
  $region13: #{mla_forward.1} parent=0 // pred_fallthru
    _
  // Predicated region
  $region14: #{mla_forward.1} parent=0 // pred_check
    _
  $region15: #{mla_forward.1} parent=0 // pred_check_branch
    %1012 = sbr.rel (0) target = $region17
  $region16: #{mla_forward.1} parent=0 // pred_region
    _
  $region17: #{mla_forward.1} parent=0 // pred_fallthru
    _

</llo_original>
